<compile_context>
chip_gen: v6e
topology: v6e:2x2x1
jax: 0.10.0
libtpu: 0.0.40
codegen_flags: <defaults>
</compile_context>

<pallas_src>
import jax
import jax.numpy as jnp
from jax.experimental import pallas as pl
from jax.experimental.pallas import tpu as pltpu

IN_F, HID_F, OUT_F = 2, 5, 1
LANES = 128


def circle_model_kernel(coef_ref, x_ref, o_ref):
    # coef_ref: (3,)            SMEM  [c0, c1, cb]  (collapsed affine map)
    # x_ref   : (2, TBR, 128)   VMEM  feature-major, batch dense on sublanes+lanes
    # o_ref   : (TBR, 128)      VMEM
    c0 = coef_ref[0]
    c1 = coef_ref[1]
    cb = coef_ref[2]
    x0 = x_ref[0]                                   # (TBR, 128)
    x1 = x_ref[1]                                   # (TBR, 128)
    o_ref[...] = (c0 * x0 + c1 * x1 + cb).astype(o_ref.dtype)


def circle_model_forward(x, w1, b1, w2, b2, *, tile_rows=256):
    """x: [B, 2] f32, w1: [2,5], b1: [5], w2: [5,1], b2: [1] -> [B, 1] logits.

    (w1/w2 are kept as [in, out], i.e. the transpose of nn.Linear.weight.)
    """
    B = x.shape[0]

    rows = pl.cdiv(B, LANES)                        # rows of 128 batch elems
    # Tile rows: multiple of 8 (sublane constraint), capped by requested size.
    tbr = min(tile_rows, ((rows + 7) // 8) * 8)
    tbr = max(tbr, 8)
    n_blocks = pl.cdiv(rows, tbr)
    Rp = n_blocks * tbr
    Bp = Rp * LANES

    # Collapse the two linears into one affine map (exact: no activation).
    w1f = w1.astype(jnp.float32)
    w2f = w2.astype(jnp.float32)
    c = (w1f @ w2f).reshape(-1)                                   # (2,)
    cb = (b1.astype(jnp.float32) @ w2f + b2.astype(jnp.float32)).reshape(-1)  # (1,)
    coef = jnp.concatenate([c, cb]).astype(jnp.float32)           # (3,)

    # Feature-major, dense (2, Rp, 128) layout, zero-padded batch tail.
    # TODO(synk): end-to-end callers should keep x in this layout to avoid the
    # extra HBM round trip of this transpose/pad copy.
    x_fm = jnp.zeros((IN_F, Bp), jnp.float32).at[:, :B].set(x.T.astype(jnp.float32))
    x_3d = x_fm.reshape(IN_F, Rp, LANES)

    out = pl.pallas_call(
        circle_model_kernel,
        out_shape=jax.ShapeDtypeStruct((Rp, LANES), jnp.float32),
        grid_spec=pltpu.PrefetchScalarGridSpec(
            num_scalar_prefetch=0,
            grid=(n_blocks,),
            in_specs=[
                pl.BlockSpec(memory_space=pltpu.MemorySpace.SMEM),       # coef
                pl.BlockSpec((IN_F, tbr, LANES), lambda i: (0, i, 0)),   # x tile
            ],
            out_specs=pl.BlockSpec((tbr, LANES), lambda i: (i, 0)),
        ),
        compiler_params=pltpu.CompilerParams(
            dimension_semantics=("parallel",)),      # shard batch tiles over TCs
        cost_estimate=pl.CostEstimate(
            flops=4 * Bp,
            transcendentals=0,
            bytes_accessed=4 * (IN_F + OUT_F) * Bp),
    )(coef, x_3d)

    return out.reshape(Bp, 1)[:B, :]                 # back to [B, 1]


def init_params(key):
    """Deterministic init matching nn.Linear shapes (weights kept as [in, out])."""
    k1, k2, k3, k4 = jax.random.split(key, 4)
    w1 = jax.random.normal(k1, (2, 5), jnp.float32) * 0.5   # layer1.weight.T
    b1 = jax.random.normal(k2, (5,), jnp.float32) * 0.1     # layer1.bias
    w2 = jax.random.normal(k3, (5, 1), jnp.float32) * 0.5   # layer2.weight.T
    b2 = jax.random.normal(k4, (1,), jnp.float32) * 0.1     # layer2.bias
    return w1, b1, w2, b2


if __name__ == "__main__":
    key = jax.random.PRNGKey(0)
    kx, kp, kx2 = jax.random.split(key, 3)
    w1, b1, w2, b2 = init_params(kp)

    # Case 1: small batch, not a multiple of 128 (single grid block, pad path).
    B1 = 200
    x1 = jax.random.normal(kx, (B1, 2), jnp.float32)
    out1 = jax.block_until_ready(circle_model_forward(x1, w1, b1, w2, b2))
    ref1 = (x1 @ w1 + b1) @ w2 + b2
    assert out1.shape == (B1, 1)
    assert jnp.allclose(out1, ref1, atol=1e-5, rtol=1e-5)

    # Case 2: larger batch with small tiles to exercise the multi-block,
    # pipelined grid path (rows=24, tbr=8 -> 3 grid steps).
    B2 = 3000
    x2 = jax.random.normal(kx2, (B2, 2), jnp.float32)
    out2 = jax.block_until_ready(
        circle_model_forward(x2, w1, b1, w2, b2, tile_rows=8))
    ref2 = (x2 @ w1 + b1) @ w2 + b2
    assert out2.shape == (B2, 1)
    assert jnp.allclose(out2, ref2, atol=1e-5, rtol=1e-5)

    print("KERNEL_OK")
</pallas_src>

<mosaic_0001>
module attributes {stable_mosaic.version = 11 : i64} {
  func.func @circle_model_kernel(%arg0: i32, %arg1: memref<3xf32, #tpu.memory_space<smem>>, %arg2: memref<2x8x128xf32, #tpu.memory_space<vmem>>, %arg3: memref<8x128xf32, #tpu.memory_space<vmem>>) attributes {dimension_semantics = [#tpu.dimension_semantics<parallel>], iteration_bounds = array<i64: 1>, scalar_prefetch = 0 : i64, scratch_operands = 0 : i64, tpu.core_type = #tpu.core_type<tc>, window_params = [{transform_indices = @transform_0, window_bounds = array<i64: 3>}, {transform_indices = @transform_1, window_bounds = array<i64: 2, 8, 128>}, {transform_indices = @transform_2, window_bounds = array<i64: 8, 128>}]} {
    %c0 = arith.constant 0 : index
    %0 = memref.load %arg1[%c0] : memref<3xf32, #tpu.memory_space<smem>>
    %c1 = arith.constant 1 : index
    %1 = memref.load %arg1[%c1] : memref<3xf32, #tpu.memory_space<smem>>
    %c2 = arith.constant 2 : index
    %2 = memref.load %arg1[%c2] : memref<3xf32, #tpu.memory_space<smem>>
    %c0_0 = arith.constant 0 : index
    %c0_1 = arith.constant 0 : index
    %c0_2 = arith.constant 0 : index
    %3 = vector.load %arg2[%c0_0, %c0_1, %c0_2] : memref<2x8x128xf32, #tpu.memory_space<vmem>>, vector<1x8x128xf32>
    %4 = vector.shape_cast %3 : vector<1x8x128xf32> to vector<8x128xf32>
    %c1_3 = arith.constant 1 : index
    %c0_4 = arith.constant 0 : index
    %c0_5 = arith.constant 0 : index
    %5 = vector.load %arg2[%c1_3, %c0_4, %c0_5] : memref<2x8x128xf32, #tpu.memory_space<vmem>>, vector<1x8x128xf32>
    %6 = vector.shape_cast %5 : vector<1x8x128xf32> to vector<8x128xf32>
    %7 = vector.broadcast %0 : f32 to vector<8x128xf32>
    %8 = arith.mulf %7, %4 : vector<8x128xf32>
    %9 = vector.broadcast %1 : f32 to vector<8x128xf32>
    %10 = arith.mulf %9, %6 : vector<8x128xf32>
    %11 = arith.addf %8, %10 : vector<8x128xf32>
    %12 = vector.broadcast %2 : f32 to vector<8x128xf32>
    %13 = arith.addf %11, %12 : vector<8x128xf32>
    %c0_6 = arith.constant 0 : index
    %c0_7 = arith.constant 0 : index
    %14 = vector.load %arg3[%c0_6, %c0_7] : memref<8x128xf32, #tpu.memory_space<vmem>>, vector<8x128xf32>
    tpu.vector_store %arg3[%c0_6, %c0_7], %13 {strides = array<i32>} : memref<8x128xf32, #tpu.memory_space<vmem>>, vector<8x128xf32>,
    return
  }
  func.func @transform_0(%arg0: i32) -> i32 {
    %c0_i32 = arith.constant 0 : i32
    %c0_i32_0 = arith.constant 0 : i32
    return %c0_i32 : i32
  }
  func.func @transform_1(%arg0: i32) -> (i32, i32, i32) {
    %c0_i32 = arith.constant 0 : i32
    %c0_i32_0 = arith.constant 0 : i32
    %c0_i32_1 = arith.constant 0 : i32
    return %c0_i32, %arg0, %c0_i32_0 : i32, i32, i32
  }
  func.func @transform_2(%arg0: i32) -> (i32, i32) {
    %c0_i32 = arith.constant 0 : i32
    %c0_i32_0 = arith.constant 0 : i32
    return %arg0, %c0_i32 : i32, i32
  }
}

</mosaic_0001>

<llo_original>
// kernel: tpu_custom_call.1
$region0: #{tpu_custom_call.1}
  #allocation0 [shape = 'u32[]', space=smem, size = 0x4, offset = 0x4, fixed_abs, tag = 'smem constant byte address 0x4 - core index']
  #allocation1 [shape = 'u32[144,128]{1,0:T(1,128)}', space=vmem, size = 0x12000, scoped, tag = 'internal scratch']
  %s0 = inlined_call_operand.hbm [shape: f32[3], index: 0, kind: input, shape index: {}]
  %s1 = inlined_call_operand.hbm [shape: f32[2,8,128], index: 1, kind: input, shape index: {}]
  %s2 = inlined_call_operand.hbm [shape: f32[8,128], index: 2, kind: output, shape index: {}]
  %s3 = sld [smem:[#allocation0]]
  $region26: #{tpu_custom_call.1} parent=0
    _
  %s5 = ssub.s32 1, %s3
  %s6 = scalar_select 0, %s5, %s3
  $region1: #{tpu_custom_call.1} parent=0
    #allocation2 [shape = 'u8[512]{0}', space=smem, size = 0x200, scoped, tag = 'input window, operand 0, single buffered']
    #allocation3 [shape = 's32[1]{0}', space=sflag, size = 0x4, scoped, tag = 'scoped memory for tpu_custom_call.1']
    #allocation4 [shape = 's32[1]{0}', space=sflag, size = 0x4, scoped, tag = 'scoped memory for tpu_custom_call.1']
    #allocation5 [shape = 's32[1]{0}', space=sflag, size = 0x4, scoped, tag = 'scoped memory for tpu_custom_call.1']
    #allocation6 [shape = 'u8[8192]{0}', space=vmem, size = 0x2000, scoped, tag = 'input window, operand 1, single buffered']
    #allocation7 [shape = 'u8[4096]{0}', space=vmem, size = 0x1000, scoped, tag = 'output window, operand 0, single buffered']
    %7 = vsyncpa [#allocation5], 0
    %8 = vsyncpa [#allocation3], 0
    %9 = vsyncpa [#allocation4], 0
    // Predicated region
    $region2: #{tpu_custom_call.1} parent=1 // pred_check
      _
    $region3: #{tpu_custom_call.1} parent=1 // pred_check_branch
      %11 = sbr.rel (0) target = $region5
    $region4: #{tpu_custom_call.1} parent=1 // pred_region
      %s13 = ssub.s32 16, 16
      %14 = vsyncadd [#allocation5], %s13
      %17 = dma.hbm_to_smem %s0, 16, [#allocation2], [#allocation5]
    $region5: #{tpu_custom_call.1} parent=1 // pred_fallthru
      _
    // Predicated region
    $region6: #{tpu_custom_call.1} parent=1 // pred_check
      _
    $region7: #{tpu_custom_call.1} parent=1 // pred_check_branch
      %19 = sbr.rel (0) target = $region9
    $region8: #{tpu_custom_call.1} parent=1 // pred_region
      %s21 = ssub.s32 256, 256
      %22 = vsyncadd [#allocation3], %s21
      %s23 = sshll.u32 [#allocation6], 4
      %s24 = int_to_ptr.vmem [resolvable:$true] %s23
      %29 = dma.hbm_to_vmem [thread:$0]  %s1, 256, %s24, [#allocation3], 128, 128, 8
    $region9: #{tpu_custom_call.1} parent=1 // pred_fallthru
      _
    // Predicated region
    $region10: #{tpu_custom_call.1} parent=1 // pred_check
      _
    $region11: #{tpu_custom_call.1} parent=1 // pred_check_branch
      %31 = sbr.rel (0) target = $region13
    $region12: #{tpu_custom_call.1} parent=1 // pred_region
      %32 = dma.done [#allocation5], 16
    $region13: #{tpu_custom_call.1} parent=1 // pred_fallthru
      _
    // Predicated region
    $region14: #{tpu_custom_call.1} parent=1 // pred_check
      _
    $region15: #{tpu_custom_call.1} parent=1 // pred_check_branch
      %34 = sbr.rel (0) target = $region17
    $region16: #{tpu_custom_call.1} parent=1 // pred_region
      %35 = dma.done [#allocation3], 256
    $region17: #{tpu_custom_call.1} parent=1 // pred_fallthru
      _
    %36 = sfence
    %s37 = sld [smem:[#allocation2]]
    %s38 = sld [smem:[#allocation2 + $0x1]]
    %s39 = sld [smem:[#allocation2 + $0x2]]
    %v40 = vld [vmem:[#allocation6] sm:$0xff]
    %s41 = scalar_lea.vmem [#allocation6], 8
    %v42 = vld [vmem:[%s41] sm:$0xff]
    %v43 = vstv %s37
    %v44 = vmul.f32 %v43, %v40
    %v45 = vstv %s38
    %v46 = vmul.f32 %v45, %v42
    %v47 = vadd.f32 %v44, %v46
    %v48 = vstv %s39
    %v49 = vadd.f32 %v47, %v48
    %50 = vst [vmem:[#allocation7] sm:$0xff] %v49
    // Predicated region
    $region18: #{tpu_custom_call.1} parent=1 // pred_check
      _
    $region19: #{tpu_custom_call.1} parent=1 // pred_check_branch
      %52 = sbr.rel (0) target = $region21
    $region20: #{tpu_custom_call.1} parent=1 // pred_region
      %s54 = ssub.s32 128, 128
      %55 = vsyncadd [#allocation4], %s54
      %s57 = sshll.u32 [#allocation7], 4
      %s58 = int_to_ptr.vmem [resolvable:$true] %s57
      %60 = dma.vmem_to_hbm [thread:$0]  %s58, 128, %s2, [#allocation4]
    $region21: #{tpu_custom_call.1} parent=1 // pred_fallthru
      _
    // Predicated region
    $region22: #{tpu_custom_call.1} parent=1 // pred_check
      _
    $region23: #{tpu_custom_call.1} parent=1 // pred_check_branch
      %62 = sbr.rel (0) target = $region25
    $region24: #{tpu_custom_call.1} parent=1 // pred_region
      %63 = dma.done [#allocation4], 128
    $region25: #{tpu_custom_call.1} parent=1 // pred_fallthru
      _
    %64 = vsyncpa [#allocation3], 1
    %65 = vsyncpa [#allocation4], 1
    %66 = vsyncpa [#allocation5], 1

</llo_original>
